<compile_context>
chip_gen: v6e
topology: v6e:2x2x1
jax: 0.10.0
libtpu: 0.0.40
codegen_flags: <defaults>
</compile_context>

<pallas_src>
import functools

import jax
import jax.numpy as jnp
from jax import lax
from jax.experimental import pallas as pl
from jax.experimental.pallas import tpu as pltpu

POS_WEIGHT = 1.4          # matches self.w = torch.tensor([1.4])
_LANES = 128
_SUBLANES = 8
_N_CORE_SPLIT = 2         # leading "parallel" grid axis (2 TCs on v7x)
_SUB_ROWS = 256           # rows per inner sub-chunk (bounds live intermediates)
_PAD_LOGIT = -1.0e4       # softplus(-1e4) == 0.0 exactly in f32


def _bce_kernel(x_ref, y_ref, o_ref, *, n, tr, tiles_per_core):
    c = pl.program_id(0)
    t = pl.program_id(1)

    @pl.when(t == 0)
    def _init():
        o_ref[...] = jnp.zeros_like(o_ref)

    lin = c * tiles_per_core + t          # un-clamped linear tile index
    tile_elems = tr * _LANES
    base = lin * tile_elems               # first flat element of this tile

    def fold_chunk(row_off, nrows, acc, masked):
        xs = x_ref[pl.ds(row_off, nrows), :].astype(jnp.float32)
        ys = y_ref[pl.ds(row_off, nrows), :].astype(jnp.float32)
        if masked:
            r = lax.broadcasted_iota(jnp.int32, (nrows, _LANES), 0)
            lane = lax.broadcasted_iota(jnp.int32, (nrows, _LANES), 1)
            eidx = (lin * tr + row_off + r) * _LANES + lane
            valid = eidx < n
            # Mask BEFORE the transcendentals: garbage / pad logits become
            # -1e4 (softplus -> exactly 0) and targets become 0.
            xs = jnp.where(valid, xs, _PAD_LOGIT)
            ys = jnp.where(valid, ys, 0.0)
        # softplus(x) = max(x, 0) + log1p(exp(-|x|))   (numerically stable)
        # loss = pw*y*softplus(-x) + (1-y)*softplus(x)
        #      = (1 + (pw-1)*y)*softplus(x) - pw*x*y
        sp = jnp.maximum(xs, 0.0) + jnp.log1p(jnp.exp(-jnp.abs(xs)))
        loss = (1.0 + (POS_WEIGHT - 1.0) * ys) * sp - (POS_WEIGHT * xs) * ys
        # Fold (nrows,128) -> (8,128) with pure VPU adds.
        return acc + loss.reshape(nrows // _SUBLANES, _SUBLANES, _LANES).sum(axis=0)

    def accumulate(masked):
        acc = jnp.zeros((_SUBLANES, _LANES), jnp.float32)
        n_sub = tr // _SUB_ROWS            # static
        rem = tr - n_sub * _SUB_ROWS       # static, multiple of 8
        if n_sub > 0:
            def body(i, a):
                off = pl.multiple_of(i * _SUB_ROWS, _SUB_ROWS)
                return fold_chunk(off, _SUB_ROWS, a, masked)
            acc = lax.fori_loop(0, n_sub, body, acc, unroll=min(n_sub, 4))
        if rem > 0:
            acc = fold_chunk(n_sub * _SUB_ROWS, rem, acc, masked)
        o_ref[0] += acc

    @pl.when(base + tile_elems <= n)       # tile entirely made of valid data
    def _fast():
        accumulate(masked=False)

    @pl.when(jnp.logical_and(base < n, base + tile_elems > n))  # boundary tile
    def _tail():
        accumulate(masked=True)
    # Tiles with base >= n (the clamped duplicate tile of the 2-way split, or
    # pure padding) contribute nothing.


def bce_with_logits_single_class(output_, target_, *, block_rows=4096):
    """Equivalent of MyBCEWithLogitsLossSingleClass().forward(output_, target_)."""
    x = output_.reshape(-1)
    y = target_.reshape(-1)
    assert x.shape == y.shape, (x.shape, y.shape)
    assert block_rows % _SUBLANES == 0
    n = x.shape[0]

    # Lane-dense (rows, 128) view.  Pad only up to the next multiple of 128
    # (min 8 rows); jnp.pad is skipped entirely when no padding is needed.
    rows = max(pl.cdiv(n, _LANES), _SUBLANES)
    padded = rows * _LANES
    if padded != n:
        # TODO(synk): for N not a multiple of 128 this is still one XLA copy
        # pass; a fully copy-free path would need 1-D / manual-DMA blocking.
        x = jnp.pad(x, (0, padded - n))
        y = jnp.pad(y, (0, padded - n))
    xp = x.reshape(rows, _LANES)
    yp = y.reshape(rows, _LANES)

    tr = min(block_rows, (rows // _SUBLANES) * _SUBLANES)  # rows per grid step
    tiles_total = pl.cdiv(rows, tr)
    tiles_per_core = pl.cdiv(tiles_total, _N_CORE_SPLIT)

    def in_map(c, t):
        # Clamp so the (rare) over-allocated tile of the 2-way split DMAs an
        # in-bounds block; the kernel skips its contribution via the
        # un-clamped index.
        return (jnp.minimum(c * tiles_per_core + t, tiles_total - 1), 0)

    kernel = functools.partial(_bce_kernel, n=n, tr=tr,
                               tiles_per_core=tiles_per_core)

    out_bytes = _N_CORE_SPLIT * _SUBLANES * _LANES * 4
    partials = pl.pallas_call(
        kernel,
        out_shape=jax.ShapeDtypeStruct((_N_CORE_SPLIT, _SUBLANES, _LANES),
                                       jnp.float32),
        grid_spec=pltpu.PrefetchScalarGridSpec(
            num_scalar_prefetch=0,
            grid=(_N_CORE_SPLIT, tiles_per_core),
            in_specs=[
                pl.BlockSpec((tr, _LANES), in_map),
                pl.BlockSpec((tr, _LANES), in_map),
            ],
            out_specs=pl.BlockSpec((1, _SUBLANES, _LANES),
                                   lambda c, t: (c, 0, 0)),
        ),
        compiler_params=pltpu.CompilerParams(
            dimension_semantics=("parallel", "arbitrary")),
        cost_estimate=pl.CostEstimate(
            flops=12 * padded,
            transcendentals=2 * padded,
            bytes_accessed=int(xp.size) * xp.dtype.itemsize
                           + int(yp.size) * yp.dtype.itemsize + out_bytes),
    )(xp, yp)

    # Final tiny reduction (2*8*128 f32) + mean over the true N elements.
    return jnp.sum(partials) / n


def _reference(output_, target_):
    # Pure-JAX reference of BCEWithLogitsLoss(pos_weight=1.4), mean reduction.
    x = output_.reshape(-1).astype(jnp.float32)
    y = target_.reshape(-1).astype(jnp.float32)
    log1pexp = jnp.log1p(jnp.exp(-jnp.abs(x)))
    sp_neg = jnp.maximum(-x, 0.0) + log1pexp
    sp_pos = jnp.maximum(x, 0.0) + log1pexp
    return jnp.mean(POS_WEIGHT * y * sp_neg + (1.0 - y) * sp_pos)


if __name__ == "__main__":
    key = jax.random.PRNGKey(0)

    # Case 1: tiny N -> min-rows bump, masked boundary tile, skipped duplicate
    # tile on the second "core" of the 2-way split.
    k1, k2 = jax.random.split(key)
    n1 = 200
    logits1 = jax.random.normal(k1, (n1, 1), dtype=jnp.float32) * 2.0
    labels1 = jax.random.bernoulli(k2, 0.5, (n1,)).astype(jnp.float32)
    out1 = jax.block_until_ready(bce_with_logits_single_class(logits1, labels1))
    ref1 = _reference(logits1, labels1)
    assert jnp.allclose(out1, ref1, rtol=1e-4, atol=1e-6), (out1, ref1)

    # Case 2: small block_rows forces multiple grid steps per core
    # (running output-block accumulator, fast + masked tiles, clamped tile).
    k3, k4 = jax.random.split(k1)
    n2 = 5000
    logits2 = jax.random.normal(k3, (n2, 1), dtype=jnp.float32) * 3.0
    labels2 = jax.random.bernoulli(k4, 0.3, (n2,)).astype(jnp.float32)
    out2 = jax.block_until_ready(
        bce_with_logits_single_class(logits2, labels2, block_rows=8))
    ref2 = _reference(logits2, labels2)
    assert jnp.allclose(out2, ref2, rtol=1e-4, atol=1e-6), (out2, ref2)

    # Case 3: N a multiple of 128 -> zero-copy (no jnp.pad) path; exercises the
    # inner sub-chunk fori_loop + static remainder chunk + partial edge block.
    k5, k6 = jax.random.split(k3)
    n3 = 300 * 128
    logits3 = jax.random.normal(k5, (n3, 1), dtype=jnp.float32)
    labels3 = jax.random.bernoulli(k6, 0.4, (n3,)).astype(jnp.float32)
    out3 = jax.block_until_ready(bce_with_logits_single_class(logits3, labels3))
    ref3 = _reference(logits3, labels3)
    assert jnp.allclose(out3, ref3, rtol=1e-4, atol=1e-6), (out3, ref3)

    print("KERNEL_OK")
</pallas_src>

<mosaic_0001>
module attributes {stable_mosaic.version = 11 : i64} {
  func.func @_bce_kernel(%arg0: i32, %arg1: i32, %arg2: memref<8x128xf32, #tpu.memory_space<vmem>>, %arg3: memref<8x128xf32, #tpu.memory_space<vmem>>, %arg4: memref<1x8x128xf32, #tpu.memory_space<vmem>>) attributes {dimension_semantics = [#tpu.dimension_semantics<parallel>, #tpu.dimension_semantics<arbitrary>], iteration_bounds = array<i64: 2, 1>, scalar_prefetch = 0 : i64, scratch_operands = 0 : i64, tpu.core_type = #tpu.core_type<tc>, window_params = [{transform_indices = @transform_0, window_bounds = array<i64: 8, 128>}, {transform_indices = @transform_1, window_bounds = array<i64: 8, 128>}, {transform_indices = @transform_2, window_bounds = array<i64: 1, 8, 128>}]} {
    %c0_i32 = arith.constant 0 : i32
    %0 = arith.cmpi eq, %arg1, %c0_i32 : i32
    %1 = arith.extui %0 : i1 to i32
    %c0_i32_0 = arith.constant 0 : i32
    %2 = arith.cmpi ne, %1, %c0_i32_0 : i32
    scf.if %2 {
      %cst = arith.constant 0.000000e+00 : f32
      %16 = vector.broadcast %cst : f32 to vector<1x8x128xf32>
      %c0 = arith.constant 0 : index
      %c0_7 = arith.constant 0 : index
      %c0_8 = arith.constant 0 : index
      %17 = vector.load %arg4[%c0, %c0_7, %c0_8] : memref<1x8x128xf32, #tpu.memory_space<vmem>>, vector<1x8x128xf32>
      tpu.vector_store %arg4[%c0, %c0_7, %c0_8], %16 {strides = array<i32>} : memref<1x8x128xf32, #tpu.memory_space<vmem>>, vector<1x8x128xf32>,
    } else {
    }
    %c1_i32 = arith.constant 1 : i32
    %3 = arith.muli %arg0, %c1_i32 : i32
    %4 = arith.addi %3, %arg1 : i32
    %c1024_i32 = arith.constant 1024 : i32
    %5 = arith.muli %4, %c1024_i32 : i32
    %c1024_i32_1 = arith.constant 1024 : i32
    %6 = arith.addi %5, %c1024_i32_1 : i32
    %c200_i32 = arith.constant 200 : i32
    %7 = arith.cmpi sle, %6, %c200_i32 : i32
    %8 = arith.extui %7 : i1 to i32
    %c0_i32_2 = arith.constant 0 : i32
    %9 = arith.cmpi ne, %8, %c0_i32_2 : i32
    scf.if %9 {
      %cst = arith.constant 0.000000e+00 : f32
      %16 = vector.broadcast %cst : f32 to vector<8x128xf32>
      %c0 = arith.constant 0 : index
      %c0_7 = arith.constant 0 : index
      %17 = vector.load %arg2[%c0, %c0_7] : memref<8x128xf32, #tpu.memory_space<vmem>>, vector<8x128xf32>
      %c0_8 = arith.constant 0 : index
      %c0_9 = arith.constant 0 : index
      %18 = vector.load %arg3[%c0_8, %c0_9] : memref<8x128xf32, #tpu.memory_space<vmem>>, vector<8x128xf32>
      %cst_10 = arith.constant 0.000000e+00 : f32
      %19 = vector.broadcast %cst_10 : f32 to vector<8x128xf32>
      %20 = arith.maximumf %17, %19 : vector<8x128xf32>
      %21 = math.absf %17 : vector<8x128xf32>
      %cst_11 = arith.constant 0.000000e+00 : f32
      %22 = vector.broadcast %cst_11 : f32 to vector<8x128xf32>
      %23 = arith.subf %22, %21 : vector<8x128xf32>
      %24 = math.exp %23 : vector<8x128xf32>
      %25 = math.log1p %24 : vector<8x128xf32>
      %26 = arith.addf %20, %25 : vector<8x128xf32>
      %cst_12 = arith.constant 4.000000e-01 : f32
      %27 = vector.broadcast %cst_12 : f32 to vector<8x128xf32>
      %28 = arith.mulf %27, %18 : vector<8x128xf32>
      %cst_13 = arith.constant 1.000000e+00 : f32
      %29 = vector.broadcast %cst_13 : f32 to vector<8x128xf32>
      %30 = arith.addf %29, %28 : vector<8x128xf32>
      %31 = arith.mulf %30, %26 : vector<8x128xf32>
      %cst_14 = arith.constant 1.400000e+00 : f32
      %32 = vector.broadcast %cst_14 : f32 to vector<8x128xf32>
      %33 = arith.mulf %32, %17 : vector<8x128xf32>
      %34 = arith.mulf %33, %18 : vector<8x128xf32>
      %35 = arith.subf %31, %34 : vector<8x128xf32>
      %36 = vector.shape_cast %35 : vector<8x128xf32> to vector<1x8x128xf32>
      %cst_15 = arith.constant dense<0.000000e+00> : vector<8x128xf32>
      %37 = vector.multi_reduction <add>, %36, %cst_15 [0] : vector<1x8x128xf32> to vector<8x128xf32>
      %38 = arith.addf %16, %37 : vector<8x128xf32>
      %c0_16 = arith.constant 0 : index
      %c0_17 = arith.constant 0 : index
      %c0_18 = arith.constant 0 : index
      %39 = vector.load %arg4[%c0_16, %c0_17, %c0_18] : memref<1x8x128xf32, #tpu.memory_space<vmem>>, vector<1x8x128xf32>
      %40 = vector.shape_cast %39 : vector<1x8x128xf32> to vector<8x128xf32>
      %41 = arith.addf %40, %38 : vector<8x128xf32>
      %c0_19 = arith.constant 0 : index
      %c0_20 = arith.constant 0 : index
      %c0_21 = arith.constant 0 : index
      %42 = vector.load %arg4[%c0_19, %c0_20, %c0_21] : memref<1x8x128xf32, #tpu.memory_space<vmem>>, vector<1x8x128xf32>
      %43 = vector.shape_cast %42 : vector<1x8x128xf32> to vector<8x128xf32>
      %44 = vector.shape_cast %41 : vector<8x128xf32> to vector<1x8x128xf32>
      tpu.vector_store %arg4[%c0_19, %c0_20, %c0_21], %44 {strides = array<i32>} : memref<1x8x128xf32, #tpu.memory_space<vmem>>, vector<1x8x128xf32>,
    } else {
    }
    %c200_i32_3 = arith.constant 200 : i32
    %10 = arith.cmpi slt, %5, %c200_i32_3 : i32
    %c1024_i32_4 = arith.constant 1024 : i32
    %11 = arith.addi %5, %c1024_i32_4 : i32
    %c200_i32_5 = arith.constant 200 : i32
    %12 = arith.cmpi sgt, %11, %c200_i32_5 : i32
    %13 = arith.andi %10, %12 : i1
    %14 = arith.extui %13 : i1 to i32
    %c0_i32_6 = arith.constant 0 : i32
    %15 = arith.cmpi ne, %14, %c0_i32_6 : i32
    scf.if %15 {
      %cst = arith.constant 0.000000e+00 : f32
      %16 = vector.broadcast %cst : f32 to vector<8x128xf32>
      %c0 = arith.constant 0 : index
      %c0_7 = arith.constant 0 : index
      %17 = vector.load %arg2[%c0, %c0_7] : memref<8x128xf32, #tpu.memory_space<vmem>>, vector<8x128xf32>
      %c0_8 = arith.constant 0 : index
      %c0_9 = arith.constant 0 : index
      %18 = vector.load %arg3[%c0_8, %c0_9] : memref<8x128xf32, #tpu.memory_space<vmem>>, vector<8x128xf32>
      %19 = tpu.iota {dimensions = array<i32: 0>} : vector<8x128xi32>
      %20 = tpu.iota {dimensions = array<i32: 1>} : vector<8x128xi32>
      %c8_i32 = arith.constant 8 : i32
      %21 = arith.muli %4, %c8_i32 : i32
      %c0_i32_10 = arith.constant 0 : i32
      %22 = arith.addi %21, %c0_i32_10 : i32
      %23 = vector.broadcast %22 : i32 to vector<8x128xi32>
      %24 = arith.addi %23, %19 : vector<8x128xi32>
      %c128_i32 = arith.constant 128 : i32
      %25 = vector.broadcast %c128_i32 : i32 to vector<8x128xi32>
      %26 = arith.muli %24, %25 : vector<8x128xi32>
      %27 = arith.addi %26, %20 : vector<8x128xi32>
      %c200_i32_11 = arith.constant 200 : i32
      %28 = vector.broadcast %c200_i32_11 : i32 to vector<8x128xi32>
      %29 = arith.cmpi slt, %27, %28 : vector<8x128xi32>
      %cst_12 = arith.constant -1.000000e+04 : f32
      %30 = vector.broadcast %cst_12 : f32 to vector<8x128xf32>
      %31 = arith.select %29, %17, %30 : vector<8x128xi1>, vector<8x128xf32>
      %cst_13 = arith.constant 0.000000e+00 : f32
      %32 = vector.broadcast %cst_13 : f32 to vector<8x128xf32>
      %33 = arith.select %29, %18, %32 : vector<8x128xi1>, vector<8x128xf32>
      %cst_14 = arith.constant 0.000000e+00 : f32
      %34 = vector.broadcast %cst_14 : f32 to vector<8x128xf32>
      %35 = arith.maximumf %31, %34 : vector<8x128xf32>
      %36 = math.absf %31 : vector<8x128xf32>
      %cst_15 = arith.constant 0.000000e+00 : f32
      %37 = vector.broadcast %cst_15 : f32 to vector<8x128xf32>
      %38 = arith.subf %37, %36 : vector<8x128xf32>
      %39 = math.exp %38 : vector<8x128xf32>
      %40 = math.log1p %39 : vector<8x128xf32>
      %41 = arith.addf %35, %40 : vector<8x128xf32>
      %cst_16 = arith.constant 4.000000e-01 : f32
      %42 = vector.broadcast %cst_16 : f32 to vector<8x128xf32>
      %43 = arith.mulf %42, %33 : vector<8x128xf32>
      %cst_17 = arith.constant 1.000000e+00 : f32
      %44 = vector.broadcast %cst_17 : f32 to vector<8x128xf32>
      %45 = arith.addf %44, %43 : vector<8x128xf32>
      %46 = arith.mulf %45, %41 : vector<8x128xf32>
      %cst_18 = arith.constant 1.400000e+00 : f32
      %47 = vector.broadcast %cst_18 : f32 to vector<8x128xf32>
      %48 = arith.mulf %47, %31 : vector<8x128xf32>
      %49 = arith.mulf %48, %33 : vector<8x128xf32>
      %50 = arith.subf %46, %49 : vector<8x128xf32>
      %51 = vector.shape_cast %50 : vector<8x128xf32> to vector<1x8x128xf32>
      %cst_19 = arith.constant dense<0.000000e+00> : vector<8x128xf32>
      %52 = vector.multi_reduction <add>, %51, %cst_19 [0] : vector<1x8x128xf32> to vector<8x128xf32>
      %53 = arith.addf %16, %52 : vector<8x128xf32>
      %c0_20 = arith.constant 0 : index
      %c0_21 = arith.constant 0 : index
      %c0_22 = arith.constant 0 : index
      %54 = vector.load %arg4[%c0_20, %c0_21, %c0_22] : memref<1x8x128xf32, #tpu.memory_space<vmem>>, vector<1x8x128xf32>
      %55 = vector.shape_cast %54 : vector<1x8x128xf32> to vector<8x128xf32>
      %56 = arith.addf %55, %53 : vector<8x128xf32>
      %c0_23 = arith.constant 0 : index
      %c0_24 = arith.constant 0 : index
      %c0_25 = arith.constant 0 : index
      %57 = vector.load %arg4[%c0_23, %c0_24, %c0_25] : memref<1x8x128xf32, #tpu.memory_space<vmem>>, vector<1x8x128xf32>
      %58 = vector.shape_cast %57 : vector<1x8x128xf32> to vector<8x128xf32>
      %59 = vector.shape_cast %56 : vector<8x128xf32> to vector<1x8x128xf32>
      tpu.vector_store %arg4[%c0_23, %c0_24, %c0_25], %59 {strides = array<i32>} : memref<1x8x128xf32, #tpu.memory_space<vmem>>, vector<1x8x128xf32>,
    } else {
    }
    return
  }
  func.func @transform_0(%arg0: i32, %arg1: i32) -> (i32, i32) {
    %c1_i32 = arith.constant 1 : i32
    %0 = arith.muli %arg0, %c1_i32 : i32
    %1 = arith.addi %0, %arg1 : i32
    %c0_i32 = arith.constant 0 : i32
    %2 = arith.minsi %1, %c0_i32 : i32
    %c0_i32_0 = arith.constant 0 : i32
    %c0_i32_1 = arith.constant 0 : i32
    return %2, %c0_i32_0 : i32, i32
  }
  func.func @transform_1(%arg0: i32, %arg1: i32) -> (i32, i32) {
    %c1_i32 = arith.constant 1 : i32
    %0 = arith.muli %arg0, %c1_i32 : i32
    %1 = arith.addi %0, %arg1 : i32
    %c0_i32 = arith.constant 0 : i32
    %2 = arith.minsi %1, %c0_i32 : i32
    %c0_i32_0 = arith.constant 0 : i32
    %c0_i32_1 = arith.constant 0 : i32
    return %2, %c0_i32_0 : i32, i32
  }
  func.func @transform_2(%arg0: i32, %arg1: i32) -> (i32, i32, i32) {
    %c0_i32 = arith.constant 0 : i32
    %c0_i32_0 = arith.constant 0 : i32
    %c0_i32_1 = arith.constant 0 : i32
    return %arg0, %c0_i32, %c0_i32_0 : i32, i32, i32
  }
}

</mosaic_0001>

<llo_original>
// kernel: tpu_custom_call.1
$region0: #{tpu_custom_call.1}
  #allocation0 [shape = 'u32[]', space=smem, size = 0x4, offset = 0x4, fixed_abs, tag = 'smem constant byte address 0x4 - core index']
  #allocation1 [shape = 'u32[144,128]{1,0:T(1,128)}', space=vmem, size = 0x12000, scoped, tag = 'internal scratch']
  %s0 = inlined_call_operand.hbm [shape: f32[8,128], index: 0, kind: input, shape index: {}]
  %s1 = inlined_call_operand.hbm [shape: f32[8,128], index: 1, kind: input, shape index: {}]
  %s2 = inlined_call_operand.hbm [shape: f32[2,8,128], index: 2, kind: output, shape index: {}]
  %s3 = sld [smem:[#allocation0]]
  $region61: #{tpu_custom_call.1} parent=0
    _
  %s5 = ssub.s32 1, %s3
  %s6 = scalar_select 0, %s5, %s3
  $region1: #{tpu_custom_call.1} parent=0
    #allocation2 [shape = 'u8[8192]{0}', space=vmem, size = 0x2000, scoped, tag = 'input window, operand 0']
    #allocation3 [shape = 's32[2]{0}', space=sflag, size = 0x8, scoped, tag = 'scoped memory for tpu_custom_call.1']
    #allocation4 [shape = 's32[2]{0}', space=sflag, size = 0x8, scoped, tag = 'scoped memory for tpu_custom_call.1']
    #allocation5 [shape = 'u8[8192]{0}', space=vmem, size = 0x2000, scoped, tag = 'input window, operand 1']
    #allocation6 [shape = 's32[2]{0}', space=sflag, size = 0x8, scoped, tag = 'scoped memory for tpu_custom_call.1']
    #allocation7 [shape = 'u8[8192]{0}', space=vmem, size = 0x2000, scoped, tag = 'output window, operand 0']
    %7 = vsyncpa [#allocation3], 0
    %s8 = scalar_lea.sflag [#allocation3], 1
    %9 = vsyncpa %s8, 0
    %10 = vsyncpa [#allocation6], 0
    %s11 = scalar_lea.sflag [#allocation6], 1
    %12 = vsyncpa %s11, 0
    %13 = vsyncpa [#allocation4], 0
    %s14 = scalar_lea.sflag [#allocation4], 1
    %15 = vsyncpa %s14, 0
    loop: start=0, step=1, limit=4
    $region2: #{tpu_custom_call.1} parent=1 // loop_pre_header
      _
    $region3: #{tpu_custom_call.1} parent=1 // loop_header
      %s17 = sphi 0, %s21
      %p18 = scmp.ge.s32.totalorder %s17, 4
      %s24 = sphi 0, %s36
      %s25 = sphi 0, %s32
      %s26 = sphi 0, %s24
      %s27 = sphi 0, %s25
      %s28 = sphi 0, %s26
      %s29 = sphi 0, %s27
      %s45 = sphi 0, %s47
      %s48 = sphi 0, %s45
      %s49 = sphi 0, %s48
      %s65 = sphi 0, %s49
      %s77 = sphi 0, %s79
      %s80 = sphi 0, %s77
      %s81 = sphi 0, %s80
      %s97 = sphi 0, %s81
      %s103 = sphi 0, %s105
      %s106 = sphi 0, %s103
      %s107 = sphi 0, %s106
      %s123 = sphi 0, %s107
    $region4: #{tpu_custom_call.1} parent=1 // loop_header_branch
      %20 = sbr.rel (%p18) target = $region8
    $region5: #{tpu_custom_call.1} parent=1 // loop_body
      %s22 = ssub.s32 %s17, 1
      %s23 = ssub.s32 %s17, 2
      %s30 = sadd.s32 1, %s25
      %p31 = scmp.ge.s32.totalorder %s30, 1
      %s32 = scalar_select %p31, 0, %s30
      %s33 = sadd.s32 1, %s24
      %s34 = scalar_select %p31, %s33, %s24
      %p35 = scmp.ge.s32.totalorder %s34, 2
      %s36 = scalar_select %p35, 0, %s34
      %s37 = sadd.s32 %s24, %s25
      %p38 = scmp.lt.s32.totalorder %s37, 0
      %s39 = scalar_select %p38, %s37, 0
      %s40 = sadd.s32 %s36, %s32
      %p41 = scmp.lt.s32.totalorder %s40, 0
      %s42 = scalar_select %p41, %s40, 0
      %s43 = ssub.s32 %s39, %s42
      %p44 = scmp.eq.s32.totalorder %s43, 0
      %s46 = sadd.s32 %s45, 1
      %s47 = scalar_select %p44, %s45, %s46
      %p50 = pneg %p44
      %p51 = scmp.eq.s32.totalorder %s17, 1
      %p52 = por %p50, %p51
      %p53 = scmp.ne.s32.totalorder %s45, %s48
      %p54 = scmp.eq.s32.totalorder %s17, 0
      %p55 = por %p53, %p54
      %p56 = scmp.ne.s32.totalorder %s45, %s48
      %p57 = scmp.eq.s32.totalorder %s22, 1
      %p58 = por %p56, %p57
      %p59 = scmp.ne.s32.totalorder %s48, %s49
      %p60 = scmp.eq.s32.totalorder %s22, 0
      %p61 = por %p59, %p60
      %p62 = scmp.ne.s32.totalorder %s48, %s49
      %p63 = scmp.eq.s32.totalorder %s23, 1
      %p64 = por %p62, %p63
      %p66 = scmp.ne.s32.totalorder %s49, %s65
      %p67 = scmp.eq.s32.totalorder %s23, 0
      %p68 = por %p66, %p67
      %s69 = sadd.s32 %s24, %s25
      %p70 = scmp.lt.s32.totalorder %s69, 0
      %s71 = scalar_select %p70, %s69, 0
      %s72 = sadd.s32 %s36, %s32
      %p73 = scmp.lt.s32.totalorder %s72, 0
      %s74 = scalar_select %p73, %s72, 0
      %s75 = ssub.s32 %s71, %s74
      %p76 = scmp.eq.s32.totalorder %s75, 0
      %s78 = sadd.s32 %s77, 1
      %s79 = scalar_select %p76, %s77, %s78
      %p82 = pneg %p76
      %p83 = scmp.eq.s32.totalorder %s17, 1
      %p84 = por %p82, %p83
      %p85 = scmp.ne.s32.totalorder %s77, %s80
      %p86 = scmp.eq.s32.totalorder %s17, 0
      %p87 = por %p85, %p86
      %p88 = scmp.ne.s32.totalorder %s77, %s80
      %p89 = scmp.eq.s32.totalorder %s22, 1
      %p90 = por %p88, %p89
      %p91 = scmp.ne.s32.totalorder %s80, %s81
      %p92 = scmp.eq.s32.totalorder %s22, 0
      %p93 = por %p91, %p92
      %p94 = scmp.ne.s32.totalorder %s80, %s81
      %p95 = scmp.eq.s32.totalorder %s23, 1
      %p96 = por %p94, %p95
      %p98 = scmp.ne.s32.totalorder %s81, %s97
      %p99 = scmp.eq.s32.totalorder %s23, 0
      %p100 = por %p98, %p99
      %s101 = ssub.s32 %s24, %s36
      %p102 = scmp.eq.s32.totalorder %s101, 0
      %s104 = sadd.s32 %s103, 1
      %s105 = scalar_select %p102, %s103, %s104
      %p108 = pneg %p102
      %p109 = scmp.eq.s32.totalorder %s17, 1
      %p110 = por %p108, %p109
      %p111 = scmp.ne.s32.totalorder %s103, %s106
      %p112 = scmp.eq.s32.totalorder %s17, 0
      %p113 = por %p111, %p112
      %p114 = scmp.ne.s32.totalorder %s103, %s106
      %p115 = scmp.eq.s32.totalorder %s22, 1
      %p116 = por %p114, %p115
      %p117 = scmp.ne.s32.totalorder %s106, %s107
      %p118 = scmp.eq.s32.totalorder %s22, 0
      %p119 = por %p117, %p118
      %p120 = scmp.ne.s32.totalorder %s106, %s107
      %p121 = scmp.eq.s32.totalorder %s23, 1
      %p122 = por %p120, %p121
      %p124 = scmp.ne.s32.totalorder %s107, %s123
      %p125 = scmp.eq.s32.totalorder %s23, 0
      %p126 = por %p124, %p125
      %p127 = scmp.le.s32.totalorder 1, %s17
      %p128 = scmp.lt.s32.totalorder %s17, 3
      %p129 = pnand %p127, %p128
      %p130 = pneg %p129
      // Predicated region
      $region9: #{tpu_custom_call.1} parent=5 // pred_check
        _
      $region10: #{tpu_custom_call.1} parent=5 // pred_check_branch
        %132 = sbr.rel (%p129) target = $region12
      $region11: #{tpu_custom_call.1} parent=5 // pred_region
        %s133 = ssub.s32 %s17, 1
      $region12: #{tpu_custom_call.1} parent=5 // pred_fallthru
        _
      %p134 = scmp.lt.s32.totalorder %s17, 2
      // Predicated region
      $region13: #{tpu_custom_call.1} parent=5 // pred_check
        %p135 = pneg %p134
      $region14: #{tpu_custom_call.1} parent=5 // pred_check_branch
        %137 = sbr.rel (%p135) target = $region16
      $region15: #{tpu_custom_call.1} parent=5 // pred_region
        // Predicated region
        $region17: #{tpu_custom_call.1} parent=15 // pred_check
          %p138 = pneg %p55
        $region18: #{tpu_custom_call.1} parent=15 // pred_check_branch
          %140 = sbr.rel (%p138) target = $region20
        $region19: #{tpu_custom_call.1} parent=15 // pred_region
          %s141 = sand.u32 %s45, 1
          %s142 = scalar_lea.sflag [#allocation3], %s141
          %s143 = sand.u32 %s45, 1
          %s144 = smul.addr %s143, 8
          %s145 = scalar_lea.vmem [#allocation2], %s144
          %s146 = sadd.s32 %s24, %s25
          %p147 = scmp.lt.s32.totalorder %s146, 0
          %s148 = scalar_select %p147, %s146, 0
          %s150 = ssub.s32 128, 128
          %151 = vsyncadd %s142, %s150
          %s152 = smul.addr %s148, 128
          %s153 = scalar_lea.hbm %s0, %s152
          %s155 = sshll.u32 %s145, 4
          %s156 = int_to_ptr.vmem [resolvable:$true] %s155
          %158 = dma.hbm_to_vmem [thread:$0]  %s153, 128, %s156, %s142
        $region20: #{tpu_custom_call.1} parent=15 // pred_fallthru
          _
        // Predicated region
        $region21: #{tpu_custom_call.1} parent=15 // pred_check
          %p159 = pneg %p87
        $region22: #{tpu_custom_call.1} parent=15 // pred_check_branch
          %161 = sbr.rel (%p159) target = $region24
        $region23: #{tpu_custom_call.1} parent=15 // pred_region
          %s162 = sand.u32 %s77, 1
          %s163 = scalar_lea.sflag [#allocation6], %s162
          %s164 = sand.u32 %s77, 1
          %s165 = smul.addr %s164, 8
          %s166 = scalar_lea.vmem [#allocation5], %s165
          %s167 = sadd.s32 %s24, %s25
          %p168 = scmp.lt.s32.totalorder %s167, 0
          %s169 = scalar_select %p168, %s167, 0
          %s171 = ssub.s32 128, 128
          %172 = vsyncadd %s163, %s171
          %s173 = smul.addr %s169, 128
          %s174 = scalar_lea.hbm %s1, %s173
          %s176 = sshll.u32 %s166, 4
          %s177 = int_to_ptr.vmem [resolvable:$true] %s176
          %179 = dma.hbm_to_vmem [thread:$0]  %s174, 128, %s177, %s163
        $region24: #{tpu_custom_call.1} parent=15 // pred_fallthru
          _
      $region16: #{tpu_custom_call.1} parent=5 // pred_fallthru
        _
      %p180 = scmp.le.s32.totalorder 1, %s17
      %p181 = scmp.lt.s32.totalorder %s17, 3
      %p182 = pnand %p180, %p181
      %p183 = pneg %p182
      // Predicated region
      $region25: #{tpu_custom_call.1} parent=5 // pred_check
        _
      $region26: #{tpu_custom_call.1} parent=5 // pred_check_branch
        %185 = sbr.rel (%p182) target = $region28
      $region27: #{tpu_custom_call.1} parent=5 // pred_region
        %s186 = ssub.s32 %s17, 1
        %s187 = sand.u32 %s48, 1
        %s188 = scalar_lea.sflag [#allocation3], %s187
        %s189 = sand.u32 %s48, 1
        %s190 = smul.addr %s189, 8
        %s191 = scalar_lea.vmem [#allocation2], %s190
        // Predicated region
        $region29: #{tpu_custom_call.1} parent=27 // pred_check
          %p192 = pneg %p61
        $region30: #{tpu_custom_call.1} parent=27 // pred_check_branch
          %194 = sbr.rel (%p192) target = $region32
        $region31: #{tpu_custom_call.1} parent=27 // pred_region
          %195 = dma.done %s188, 128
        $region32: #{tpu_custom_call.1} parent=27 // pred_fallthru
          _
        %s196 = sand.u32 %s80, 1
        %s197 = scalar_lea.sflag [#allocation6], %s196
        %s198 = sand.u32 %s80, 1
        %s199 = smul.addr %s198, 8
        %s200 = scalar_lea.vmem [#allocation5], %s199
        // Predicated region
        $region33: #{tpu_custom_call.1} parent=27 // pred_check
          %p201 = pneg %p93
        $region34: #{tpu_custom_call.1} parent=27 // pred_check_branch
          %203 = sbr.rel (%p201) target = $region36
        $region35: #{tpu_custom_call.1} parent=27 // pred_region
          %204 = dma.done %s197, 128
        $region36: #{tpu_custom_call.1} parent=27 // pred_fallthru
          _
        %s205 = sand.u32 %s48, 1
        %s206 = scalar_lea.sflag [#allocation3], %s205
        %s207 = sand.u32 %s48, 1
        %s208 = smul.addr %s207, 8
        %s209 = scalar_lea.vmem [#allocation2], %s208
        %p210 = pneg %p61
        %p211 = pneg %p58
        %s212 = sand.u32 %s80, 1
        %s213 = scalar_lea.sflag [#allocation6], %s212
        %s214 = sand.u32 %s80, 1
        %s215 = smul.addr %s214, 8
        %s216 = scalar_lea.vmem [#allocation5], %s215
        %p217 = pneg %p93
        %p218 = pneg %p90
        %p219 = pneg %p119
        %p220 = pneg %p116
        %s221 = sand.u32 %s106, 1
        %s222 = scalar_lea.sflag [#allocation4], %s221
        %s223 = sand.u32 %s106, 1
        %s224 = smul.addr %s223, 8
        %s225 = scalar_lea.vmem [#allocation7], %s224
        %s226 = sadd.s32 %s26, %s27
        %p227 = scmp.lt.s32.totalorder %s226, 0
        %s228 = scalar_select %p227, %s226, 0
        %s229 = sadd.s32 %s26, %s27
        %p230 = scmp.lt.s32.totalorder %s229, 0
        %s231 = scalar_select %p230, %s229, 0
        %p232 = scmp.eq.s32.totalorder %s27, 0
        // Predicated region
        $region37: #{tpu_custom_call.1} parent=27 // pred_check
          %p233 = pneg %p232
        $region38: #{tpu_custom_call.1} parent=27 // pred_check_branch
          %235 = sbr.rel (%p233) target = $region40
        $region39: #{tpu_custom_call.1} parent=27 // pred_region
          %236 = vst [vmem:[%s225] sm:$0xff] 0.0
        $region40: #{tpu_custom_call.1} parent=27 // pred_fallthru
          _
        %s237 = sadd.s32 %s26, %s27
        %s238 = smul.u32 %s237, 1024
        %s239 = sadd.s32 %s238, 1024
        %p240 = scmp.le.s32.totalorder %s239, 200
        // Predicated region
        $region41: #{tpu_custom_call.1} parent=27 // pred_check
          %p241 = pneg %p240
        $region42: #{tpu_custom_call.1} parent=27 // pred_check_branch
          %243 = sbr.rel (%p241) target = $region44
        $region43: #{tpu_custom_call.1} parent=27 // pred_region
          %v244 = vld [vmem:[%s191] sm:$0xff]
          %v245 = vld [vmem:[%s200] sm:$0xff]
          %v246 = vmax.f32 %v244, 0.0
          %v247 = vand.u32 2147483647, %v244
          %v248 = vsub.f32 0.0, %v247
          %v249 = vmul.f32 %v248, 1.442695
          %v250 = vpow.pop %v249
          %v251 = vadd.f32 %v250, 1.0
          %v252 = vlog2.pop %v251
          %v253 = vmul.f32 %v252, 0.6931472
          %v254 = vmul.f32 -0.5, %v250
          %v255 = vadd.f32 %v254, 1.0
          %v256 = vmul.f32 %v255, %v250
          %v257 = vand.u32 2147483647, %v250
          %vm258 = vcmp.lt.f32.partialorder %v257, 0.0004427343
          %v259 = vsel %vm258, %v256, %v253
          %v260 = vadd.f32 %v246, %v259
          %v261 = vmul.f32 %v245, 0.4
          %v262 = vadd.f32 %v261, 1.0
          %v263 = vmul.f32 %v262, %v260
          %v264 = vmul.f32 %v244, 1.4
          %v265 = vmul.f32 %v264, %v245
          %v266 = vsub.f32 %v263, %v265
          %v267 = vadd.f32 %v266, 0.0
          %v268 = vadd.f32 %v267, 0.0
          %v269 = vld [vmem:[%s225] sm:$0xff]
          %v270 = vadd.f32 %v269, %v268
          %271 = vst [vmem:[%s225] sm:$0xff] %v270
        $region44: #{tpu_custom_call.1} parent=27 // pred_fallthru
          _
        %p272 = scmp.lt.s32.totalorder %s238, 200
        %p273 = scmp.gt.s32.totalorder %s239, 200
        %p274 = pnand %p272, %p273
        %p275 = pneg %p274
        // Predicated region
        $region45: #{tpu_custom_call.1} parent=27 // pred_check
          _
        $region46: #{tpu_custom_call.1} parent=27 // pred_check_branch
          %277 = sbr.rel (%p274) target = $region48
        $region47: #{tpu_custom_call.1} parent=27 // pred_region
          %v278 = vld [vmem:[%s191] sm:$0xff]
          %v279 = vld [vmem:[%s200] sm:$0xff]
          %v280 = vlaneseq
          %v281 = vshrl.u32 %v280, 7
          %v282 = vlaneseq
          %v283 = vand.u32 %v282, 127
          %s284 = smul.u32 %s237, 8
          %v285 = vstv %s284
          %v286 = vadd.s32 %v285, %v281
          %v287 = vmul.u32 %v286, 128
          %v288 = vadd.s32 %v287, %v283
          %vm289 = vcmp.lt.s32.totalorder %v288, 200
          %v290 = vsel %vm289, %v278, -10000.0
          %v291 = vsel %vm289, %v279, 0.0
          %v292 = vmax.f32 %v290, 0.0
          %v293 = vand.u32 2147483647, %v290
          %v294 = vsub.f32 0.0, %v293
          %v295 = vmul.f32 %v294, 1.442695
          %v296 = vpow.pop %v295
          %v297 = vadd.f32 %v296, 1.0
          %v298 = vlog2.pop %v297
          %v299 = vmul.f32 %v298, 0.6931472
          %v300 = vmul.f32 -0.5, %v296
          %v301 = vadd.f32 %v300, 1.0
          %v302 = vmul.f32 %v301, %v296
          %v303 = vand.u32 2147483647, %v296
          %vm304 = vcmp.lt.f32.partialorder %v303, 0.0004427343
          %v305 = vsel %vm304, %v302, %v299
          %v306 = vadd.f32 %v292, %v305
          %v307 = vmul.f32 %v291, 0.4
          %v308 = vadd.f32 %v307, 1.0
          %v309 = vmul.f32 %v308, %v306
          %v310 = vmul.f32 %v290, 1.4
          %v311 = vmul.f32 %v310, %v291
          %v312 = vsub.f32 %v309, %v311
          %v313 = vadd.f32 %v312, 0.0
          %v314 = vadd.f32 %v313, 0.0
          %v315 = vld [vmem:[%s225] sm:$0xff]
          %v316 = vadd.f32 %v315, %v314
          %317 = vst [vmem:[%s225] sm:$0xff] %v316
        $region48: #{tpu_custom_call.1} parent=27 // pred_fallthru
          _
        %s318 = sand.u32 %s106, 1
        %s319 = scalar_lea.sflag [#allocation4], %s318
        %s320 = sand.u32 %s106, 1
        %s321 = smul.addr %s320, 8
        %s322 = scalar_lea.vmem [#allocation7], %s321
        // Predicated region
        $region49: #{tpu_custom_call.1} parent=27 // pred_check
          %p323 = pneg %p116
        $region50: #{tpu_custom_call.1} parent=27 // pred_check_branch
          %325 = sbr.rel (%p323) target = $region52
        $region51: #{tpu_custom_call.1} parent=27 // pred_region
          %s327 = ssub.s32 128, 128
          %328 = vsyncadd %s319, %s327
          %s329 = smul.addr %s26, 128
          %s330 = scalar_lea.hbm %s2, %s329
          %s332 = sshll.u32 %s322, 4
          %s333 = int_to_ptr.vmem [resolvable:$true] %s332
          %335 = dma.vmem_to_hbm [thread:$0]  %s333, 128, %s330, %s319
        $region52: #{tpu_custom_call.1} parent=27 // pred_fallthru
          _
      $region28: #{tpu_custom_call.1} parent=5 // pred_fallthru
        _
      %p336 = scmp.le.s32.totalorder 2, %s17
      // Predicated region
      $region53: #{tpu_custom_call.1} parent=5 // pred_check
        %p337 = pneg %p336
      $region54: #{tpu_custom_call.1} parent=5 // pred_check_branch
        %339 = sbr.rel (%p337) target = $region56
      $region55: #{tpu_custom_call.1} parent=5 // pred_region
        %s340 = ssub.s32 %s17, 2
        // Predicated region
        $region57: #{tpu_custom_call.1} parent=55 // pred_check
          %p341 = pneg %p122
        $region58: #{tpu_custom_call.1} parent=55 // pred_check_branch
          %343 = sbr.rel (%p341) target = $region60
        $region59: #{tpu_custom_call.1} parent=55 // pred_region
          %s344 = sand.u32 %s107, 1
          %s345 = scalar_lea.sflag [#allocation4], %s344
          %s346 = sand.u32 %s107, 1
          %s347 = smul.addr %s346, 8
          %s348 = scalar_lea.vmem [#allocation7], %s347
          %349 = dma.done %s345, 128
        $region60: #{tpu_custom_call.1} parent=55 // pred_fallthru
          _
      $region56: #{tpu_custom_call.1} parent=5 // pred_fallthru
        _
    $region6: #{tpu_custom_call.1} parent=1 // loop_footer
      %s21 = sadd.s32 1, %s17
    $region7: #{tpu_custom_call.1} parent=1 // loop_footer_branch
      %16 = sbr.rel target = $region3
    $region8: #{tpu_custom_call.1} parent=1 // loop_exit
      _
    %350 = vsyncpa [#allocation3], 1
    %s351 = scalar_lea.sflag [#allocation3], 1
    %352 = vsyncpa %s351, 1
    %353 = vsyncpa [#allocation6], 1
    %s354 = scalar_lea.sflag [#allocation6], 1
    %355 = vsyncpa %s354, 1
    %356 = vsyncpa [#allocation4], 1
    %s357 = scalar_lea.sflag [#allocation4], 1
    %358 = vsyncpa %s357, 1

</llo_original>
